<compile_context>
chip_gen: v6e
topology: v6e:2x2x1
jax: 0.10.0
libtpu: 0.0.40
codegen_flags: <defaults>
</compile_context>

<pallas_src>
import functools
import math

import jax
import jax.numpy as jnp
from jax.experimental import pallas as pl
from jax.experimental.pallas import tpu as pltpu


def _layernorm(z, g, b, eps=1e-5):
    mu = jnp.mean(z, axis=-1, keepdims=True)
    var = jnp.mean((z - mu) ** 2, axis=-1, keepdims=True)
    return (z - mu) * jax.lax.rsqrt(var + eps) * g + b


def _gelu_exact(x):
    # nn.GELU default = exact erf-based GELU
    return 0.5 * x * (1.0 + jax.lax.erf(x * (1.0 / math.sqrt(2.0))))


# --------------------------------------------------------------------------
# Kernel 1: norm1 + fused QKV projection (row-tiled).
# --------------------------------------------------------------------------
def qkv_kernel(x_ref, g1_ref, b1_ref, wqkv_ref,
               q_ref, k_ref, v_ref, *, dim, scale):
    xb = x_ref[0]                                           # (TR, C) f32
    h1 = _layernorm(xb, g1_ref[0], b1_ref[0])               # f32 elementwise
    # One fused MXU call for q/k/v: bf16 operands, f32 accumulation.
    qkv = jnp.dot(h1.astype(jnp.bfloat16), wqkv_ref[...],
                  preferred_element_type=jnp.float32)       # (TR, 3C)
    # Fold attention scale into q here (N*C mults instead of H*N*N later).
    q_ref[0] = (qkv[:, :dim] * scale).astype(q_ref.dtype)
    k_ref[0] = qkv[:, dim:2 * dim].astype(k_ref.dtype)
    v_ref[0] = qkv[:, 2 * dim:].astype(v_ref.dtype)


# --------------------------------------------------------------------------
# Kernel 2: flash attention (online softmax over KV tiles) + proj + residual
#           + norm2 + MLP, fused in the last-KV-step epilogue.
# --------------------------------------------------------------------------
def attn_mlp_kernel(q_ref, k_ref, v_ref, x_ref,
                    pw_ref, pb_ref, g2_ref, b2_ref,
                    f1w_ref, f1b_ref, f2w_ref, f2b_ref,
                    out_ref,
                    m_scr, l_scr, acc_scr,
                    *, num_heads, head_dim):
    kv_step = pl.program_id(2)

    @pl.when(kv_step == 0)
    def _init():
        m_scr[...] = jnp.full_like(m_scr, -jnp.inf)
        l_scr[...] = jnp.zeros_like(l_scr)
        acc_scr[...] = jnp.zeros_like(acc_scr)

    tq = q_ref.shape[1]
    tk = k_ref.shape[1]

    # TODO(synk): with small head_dim (<128) the per-head layout is not
    # lane-dense; a head_dim>=128 layout (or n(hd) dot_general) would avoid
    # the XLU transposes and masked stores.
    qh = q_ref[0].reshape(tq, num_heads, head_dim).transpose(1, 0, 2)  # (H,TQ,d) bf16 (q pre-scaled)
    kh = k_ref[0].reshape(tk, num_heads, head_dim).transpose(1, 0, 2)  # (H,TK,d) bf16
    vh = v_ref[0].reshape(tk, num_heads, head_dim).transpose(1, 0, 2)  # (H,TK,d) bf16

    # Scores for this (q-tile, k-tile): bf16 MXU, f32 accumulation.
    s = jnp.einsum('hqd,hkd->hqk', qh, kh,
                   preferred_element_type=jnp.float32)                  # (H,TQ,TK)

    # Online softmax update.
    m_prev = m_scr[...]                                                 # (H,TQ,1)
    m_new = jnp.maximum(m_prev, jnp.max(s, axis=-1, keepdims=True))
    alpha = jnp.exp(m_prev - m_new)
    p = jnp.exp(s - m_new)                                              # f32 (EUP)
    l_scr[...] = alpha * l_scr[...] + jnp.sum(p, axis=-1, keepdims=True)
    acc_scr[...] = alpha * acc_scr[...] + jnp.einsum(
        'hqk,hkd->hqd', p.astype(jnp.bfloat16), vh,
        preferred_element_type=jnp.float32)                             # (H,TQ,d)
    m_scr[...] = m_new

    @pl.when(kv_step == pl.num_programs(2) - 1)
    def _finalize():
        inv_l = pl.reciprocal(l_scr[...], approx=True)                  # EUP slot
        o = acc_scr[...] * inv_l                                        # (H,TQ,d) f32
        o = o.transpose(1, 0, 2).reshape(tq, num_heads * head_dim)      # (TQ,C)

        attn_out = jnp.dot(o.astype(jnp.bfloat16), pw_ref[...],
                           preferred_element_type=jnp.float32) + pb_ref[0]
        x1 = x_ref[0] + attn_out                                        # f32 residual

        # norm2 + MLP (hidden bounded by the query tile).
        h2 = _layernorm(x1, g2_ref[0], b2_ref[0])
        hid = jnp.dot(h2.astype(jnp.bfloat16), f1w_ref[...],
                      preferred_element_type=jnp.float32) + f1b_ref[0]
        hid = _gelu_exact(hid)
        y = jnp.dot(hid.astype(jnp.bfloat16), f2w_ref[...],
                    preferred_element_type=jnp.float32) + f2b_ref[0]

        out_ref[0] = (x1 + y).astype(out_ref.dtype)


# --------------------------------------------------------------------------
# Wrapper
# --------------------------------------------------------------------------
def block_forward(x, params, num_heads, *, tq=128, tk=128, tr=128):
    B, N, C = x.shape
    head_dim = C // num_heads
    scale = head_dim ** (-0.5)
    Hm = params['fc1_w'].shape[1]
    bf16 = jnp.bfloat16

    tr = min(tr, N)
    tq = min(tq, N)
    tk = min(tk, N)
    assert N % tr == 0 and N % tq == 0 and N % tk == 0, \
        "N must be divisible by the chosen tile sizes"

    vmem_limit = 32 * 1024 * 1024  # explicit scoped-VMEM budget (safe on v5e/v6e/v7x)

    # ---- kernel 1: q/k/v projections ------------------------------------
    def const1(shape):
        return pl.BlockSpec(shape, lambda b, r: (0,) * len(shape))

    q, k, v = pl.pallas_call(
        functools.partial(qkv_kernel, dim=C, scale=scale),
        out_shape=(jax.ShapeDtypeStruct((B, N, C), bf16),
                   jax.ShapeDtypeStruct((B, N, C), bf16),
                   jax.ShapeDtypeStruct((B, N, C), bf16)),
        grid_spec=pl.GridSpec(
            grid=(B, N // tr),
            in_specs=[
                pl.BlockSpec((1, tr, C), lambda b, r: (b, r, 0)),   # x
                const1((1, C)), const1((1, C)),                     # norm1 gamma/beta
                const1((C, 3 * C)),                                 # fused qkv weight (bf16)
            ],
            out_specs=[
                pl.BlockSpec((1, tr, C), lambda b, r: (b, r, 0)),   # q (pre-scaled)
                pl.BlockSpec((1, tr, C), lambda b, r: (b, r, 0)),   # k
                pl.BlockSpec((1, tr, C), lambda b, r: (b, r, 0)),   # v
            ],
        ),
        compiler_params=pltpu.CompilerParams(
            dimension_semantics=("parallel", "parallel"),
            vmem_limit_bytes=vmem_limit),
    )(x, params['g1'], params['b1'], params['qkv_w'])

    # ---- kernel 2: flash attention + proj + residual + norm2 + MLP ------
    def const2(shape):
        # TODO(synk): add pipeline_mode=pl.Buffered(1) here to single-buffer
        # the resident weights on v7x (64 MiB VMEM) once tile sizes grow.
        return pl.BlockSpec(shape, lambda b, i, kk: (0,) * len(shape))

    out = pl.pallas_call(
        functools.partial(attn_mlp_kernel, num_heads=num_heads, head_dim=head_dim),
        out_shape=jax.ShapeDtypeStruct((B, N, C), jnp.float32),
        grid_spec=pltpu.PrefetchScalarGridSpec(
            num_scalar_prefetch=0,
            grid=(B, N // tq, N // tk),
            in_specs=[
                pl.BlockSpec((1, tq, C), lambda b, i, kk: (b, i, 0)),   # q tile
                pl.BlockSpec((1, tk, C), lambda b, i, kk: (b, kk, 0)),  # k tile
                pl.BlockSpec((1, tk, C), lambda b, i, kk: (b, kk, 0)),  # v tile
                pl.BlockSpec((1, tq, C), lambda b, i, kk: (b, i, 0)),   # x residual tile
                const2((C, C)), const2((1, C)),                         # proj w (bf16), b
                const2((1, C)), const2((1, C)),                         # norm2 gamma/beta
                const2((C, Hm)), const2((1, Hm)),                       # fc1 w (bf16), b
                const2((Hm, C)), const2((1, C)),                        # fc2 w (bf16), b
            ],
            out_specs=pl.BlockSpec((1, tq, C), lambda b, i, kk: (b, i, 0)),
            scratch_shapes=[
                pltpu.VMEM((num_heads, tq, 1), jnp.float32),          # running max
                pltpu.VMEM((num_heads, tq, 1), jnp.float32),          # running sum
                pltpu.VMEM((num_heads, tq, head_dim), jnp.float32),   # acc
            ],
        ),
        compiler_params=pltpu.CompilerParams(
            dimension_semantics=("parallel", "parallel", "arbitrary"),
            vmem_limit_bytes=vmem_limit),
    )(q, k, v, x,
      params['proj_w'], params['proj_b'],
      params['g2'], params['b2'],
      params['fc1_w'], params['fc1_b'],
      params['fc2_w'], params['fc2_b'])
    return out


# --------------------------------------------------------------------------
# Pure-JAX reference (mirrors the PyTorch forward; weights are the same bf16
# values the kernel sees, cast to f32 so only activation rounding differs).
# --------------------------------------------------------------------------
def block_reference(x, params, num_heads):
    B, N, C = x.shape
    HD = C // num_heads
    scale = HD ** (-0.5)
    f32 = jnp.float32

    qkv_w = params['qkv_w'].astype(f32)
    h1 = _layernorm(x, params['g1'][0], params['b1'][0])
    q = (h1 @ qkv_w[:, :C]) * scale
    k = h1 @ qkv_w[:, C:2 * C]
    v = h1 @ qkv_w[:, 2 * C:]

    qh = q.reshape(B, N, num_heads, HD).transpose(0, 2, 1, 3)
    kh = k.reshape(B, N, num_heads, HD).transpose(0, 2, 1, 3)
    vh = v.reshape(B, N, num_heads, HD).transpose(0, 2, 1, 3)

    attn = jnp.einsum('bhnd,bhmd->bhnm', qh, kh)
    attn = jax.nn.softmax(attn, axis=-1)
    a = jnp.einsum('bhnm,bhmd->bhnd', attn, vh)
    a = a.transpose(0, 2, 1, 3).reshape(B, N, C)
    a = a @ params['proj_w'].astype(f32) + params['proj_b'][0]

    x1 = x + a
    h2 = _layernorm(x1, params['g2'][0], params['b2'][0])
    m = _gelu_exact(h2 @ params['fc1_w'].astype(f32) + params['fc1_b'][0])
    m = m @ params['fc2_w'].astype(f32) + params['fc2_b'][0]
    return x1 + m


def init_params(key, dim, num_heads, mlp_ratio=4.0):
    hidden = int(dim * mlp_ratio)
    keys = jax.random.split(key, 7)
    s = 0.05
    bf16 = jnp.bfloat16
    return {
        'g1': jnp.ones((1, dim), jnp.float32),
        'b1': jnp.zeros((1, dim), jnp.float32),
        # fused q/kv projection weight, stored (in, 3*out) in bf16
        'qkv_w': (s * jax.random.normal(keys[0], (dim, 3 * dim), jnp.float32)).astype(bf16),
        'proj_w': (s * jax.random.normal(keys[1], (dim, dim), jnp.float32)).astype(bf16),
        'proj_b': s * jax.random.normal(keys[2], (1, dim), jnp.float32),
        'g2': jnp.ones((1, dim), jnp.float32),
        'b2': jnp.zeros((1, dim), jnp.float32),
        'fc1_w': (s * jax.random.normal(keys[3], (dim, hidden), jnp.float32)).astype(bf16),
        'fc1_b': s * jax.random.normal(keys[4], (1, hidden), jnp.float32),
        'fc2_w': (s * jax.random.normal(keys[5], (hidden, dim), jnp.float32)).astype(bf16),
        'fc2_b': s * jax.random.normal(keys[6], (1, dim), jnp.float32),
    }


if __name__ == "__main__":
    B, Himg, Wimg, C = 2, 8, 8, 32
    N = Himg * Wimg
    num_heads = 4

    key = jax.random.PRNGKey(0)
    kx, kp = jax.random.split(key)
    x = jax.random.normal(kx, (B, N, C), jnp.float32)
    params = init_params(kp, C, num_heads)

    # Small tiles so the online-softmax accumulation runs over multiple KV steps.
    out = block_forward(x, params, num_heads, tq=32, tk=32, tr=32)
    out = jax.block_until_ready(out)

    ref = block_reference(x, params, num_heads)
    assert out.shape == (B, N, C)
    max_err = float(jnp.max(jnp.abs(out - ref)))
    assert jnp.allclose(out, ref, atol=2e-2, rtol=2e-2), \
        f"mismatch vs reference (max abs err {max_err})"

    print("KERNEL_OK")
</pallas_src>

<mosaic_0001>
module attributes {stable_mosaic.version = 11 : i64} {
  func.func @qkv_kernel(%arg0: i32, %arg1: i32, %arg2: memref<1x32x32xf32, #tpu.memory_space<vmem>>, %arg3: memref<1x32xf32, #tpu.memory_space<vmem>>, %arg4: memref<1x32xf32, #tpu.memory_space<vmem>>, %arg5: memref<32x96xbf16, #tpu.memory_space<vmem>>, %arg6: memref<1x32x32xbf16, #tpu.memory_space<vmem>>, %arg7: memref<1x32x32xbf16, #tpu.memory_space<vmem>>, %arg8: memref<1x32x32xbf16, #tpu.memory_space<vmem>>) attributes {dimension_semantics = [#tpu.dimension_semantics<parallel>, #tpu.dimension_semantics<parallel>], iteration_bounds = array<i64: 2, 2>, scalar_prefetch = 0 : i64, scratch_operands = 0 : i64, tpu.core_type = #tpu.core_type<tc>, window_params = [{transform_indices = @transform_0, window_bounds = array<i64: 1, 32, 32>}, {pipeline_mode = #tpu.pipeline_mode<synchronous>, transform_indices = @transform_1, window_bounds = array<i64: 1, 32>}, {pipeline_mode = #tpu.pipeline_mode<synchronous>, transform_indices = @transform_2, window_bounds = array<i64: 1, 32>}, {pipeline_mode = #tpu.pipeline_mode<synchronous>, transform_indices = @transform_3, window_bounds = array<i64: 32, 96>}, {transform_indices = @transform_4, window_bounds = array<i64: 1, 32, 32>}, {transform_indices = @transform_5, window_bounds = array<i64: 1, 32, 32>}, {transform_indices = @transform_6, window_bounds = array<i64: 1, 32, 32>}]} {
    %c0 = arith.constant 0 : index
    %c0_0 = arith.constant 0 : index
    %c0_1 = arith.constant 0 : index
    %0 = vector.load %arg2[%c0, %c0_0, %c0_1] : memref<1x32x32xf32, #tpu.memory_space<vmem>>, vector<1x32x32xf32>
    %1 = vector.shape_cast %0 : vector<1x32x32xf32> to vector<32x32xf32>
    %c0_2 = arith.constant 0 : index
    %c0_3 = arith.constant 0 : index
    %2 = vector.load %arg3[%c0_2, %c0_3] : memref<1x32xf32, #tpu.memory_space<vmem>>, vector<1x32xf32>
    %3 = vector.shape_cast %2 : vector<1x32xf32> to vector<32xf32>
    %c0_4 = arith.constant 0 : index
    %c0_5 = arith.constant 0 : index
    %4 = vector.load %arg4[%c0_4, %c0_5] : memref<1x32xf32, #tpu.memory_space<vmem>>, vector<1x32xf32>
    %5 = vector.shape_cast %4 : vector<1x32xf32> to vector<32xf32>
    %cst = arith.constant dense<0.000000e+00> : vector<32xf32>
    %6 = vector.multi_reduction <add>, %1, %cst [1] : vector<32x32xf32> to vector<32xf32>
    %7 = vector.shape_cast %6 : vector<32xf32> to vector<32x1xf32>
    %cst_6 = arith.constant 3.200000e+01 : f32
    %8 = vector.broadcast %cst_6 : f32 to vector<32x1xf32>
    %9 = arith.divf %7, %8 : vector<32x1xf32>
    %10 = vector.broadcast %9 : vector<32x1xf32> to vector<32x32xf32>
    %11 = arith.subf %1, %10 : vector<32x32xf32>
    %12 = arith.mulf %11, %11 : vector<32x32xf32>
    %cst_7 = arith.constant dense<0.000000e+00> : vector<32xf32>
    %13 = vector.multi_reduction <add>, %12, %cst_7 [1] : vector<32x32xf32> to vector<32xf32>
    %14 = vector.shape_cast %13 : vector<32xf32> to vector<32x1xf32>
    %cst_8 = arith.constant 3.200000e+01 : f32
    %15 = vector.broadcast %cst_8 : f32 to vector<32x1xf32>
    %16 = arith.divf %14, %15 : vector<32x1xf32>
    %17 = vector.broadcast %9 : vector<32x1xf32> to vector<32x32xf32>
    %18 = arith.subf %1, %17 : vector<32x32xf32>
    %cst_9 = arith.constant 9.99999974E-6 : f32
    %19 = vector.broadcast %cst_9 : f32 to vector<32x1xf32>
    %20 = arith.addf %16, %19 : vector<32x1xf32>
    %21 = math.rsqrt %20 : vector<32x1xf32>
    %22 = vector.broadcast %21 : vector<32x1xf32> to vector<32x32xf32>
    %23 = arith.mulf %18, %22 : vector<32x32xf32>
    %24 = vector.shape_cast %3 : vector<32xf32> to vector<1x32xf32>
    %25 = vector.broadcast %24 : vector<1x32xf32> to vector<32x32xf32>
    %26 = arith.mulf %23, %25 : vector<32x32xf32>
    %27 = vector.shape_cast %5 : vector<32xf32> to vector<1x32xf32>
    %28 = vector.broadcast %27 : vector<1x32xf32> to vector<32x32xf32>
    %29 = arith.addf %26, %28 : vector<32x32xf32>
    %30 = arith.truncf %29 : vector<32x32xf32> to vector<32x32xbf16>
    %c0_10 = arith.constant 0 : index
    %c0_11 = arith.constant 0 : index
    %31 = vector.load %arg5[%c0_10, %c0_11] : memref<32x96xbf16, #tpu.memory_space<vmem>>, vector<32x96xbf16>
    %cst_12 = arith.constant dense<0.000000e+00> : vector<32x96xf32>
    %32 = tpu.matmul %30, %31, %cst_12 {dimension_numbers = #tpu.dot_dimension_numbers<[1], [0], [0], [1], [0, 0, 1, 1], [], []>} : vector<32x32xbf16>, vector<32x96xbf16>, vector<32x96xf32> -> vector<32x96xf32>
    %33 = vector.extract_strided_slice %32 {offsets = [0, 0], sizes = [32, 32], strides = [1, 1]} : vector<32x96xf32> to vector<32x32xf32>
    %cst_13 = arith.constant 0.353553385 : f32
    %34 = vector.broadcast %cst_13 : f32 to vector<32x32xf32>
    %35 = arith.mulf %33, %34 : vector<32x32xf32>
    %36 = arith.truncf %35 : vector<32x32xf32> to vector<32x32xbf16>
    %c0_14 = arith.constant 0 : index
    %c0_15 = arith.constant 0 : index
    %c0_16 = arith.constant 0 : index
    %37 = vector.load %arg6[%c0_14, %c0_15, %c0_16] : memref<1x32x32xbf16, #tpu.memory_space<vmem>>, vector<1x32x32xbf16>
    %38 = vector.shape_cast %37 : vector<1x32x32xbf16> to vector<32x32xbf16>
    %39 = vector.shape_cast %36 : vector<32x32xbf16> to vector<1x32x32xbf16>
    tpu.vector_store %arg6[%c0_14, %c0_15, %c0_16], %39 {strides = array<i32>} : memref<1x32x32xbf16, #tpu.memory_space<vmem>>, vector<1x32x32xbf16>,
    %40 = vector.extract_strided_slice %32 {offsets = [0, 32], sizes = [32, 32], strides = [1, 1]} : vector<32x96xf32> to vector<32x32xf32>
    %41 = arith.truncf %40 : vector<32x32xf32> to vector<32x32xbf16>
    %c0_17 = arith.constant 0 : index
    %c0_18 = arith.constant 0 : index
    %c0_19 = arith.constant 0 : index
    %42 = vector.load %arg7[%c0_17, %c0_18, %c0_19] : memref<1x32x32xbf16, #tpu.memory_space<vmem>>, vector<1x32x32xbf16>
    %43 = vector.shape_cast %42 : vector<1x32x32xbf16> to vector<32x32xbf16>
    %44 = vector.shape_cast %41 : vector<32x32xbf16> to vector<1x32x32xbf16>
    tpu.vector_store %arg7[%c0_17, %c0_18, %c0_19], %44 {strides = array<i32>} : memref<1x32x32xbf16, #tpu.memory_space<vmem>>, vector<1x32x32xbf16>,
    %45 = vector.extract_strided_slice %32 {offsets = [0, 64], sizes = [32, 32], strides = [1, 1]} : vector<32x96xf32> to vector<32x32xf32>
    %46 = arith.truncf %45 : vector<32x32xf32> to vector<32x32xbf16>
    %c0_20 = arith.constant 0 : index
    %c0_21 = arith.constant 0 : index
    %c0_22 = arith.constant 0 : index
    %47 = vector.load %arg8[%c0_20, %c0_21, %c0_22] : memref<1x32x32xbf16, #tpu.memory_space<vmem>>, vector<1x32x32xbf16>
    %48 = vector.shape_cast %47 : vector<1x32x32xbf16> to vector<32x32xbf16>
    %49 = vector.shape_cast %46 : vector<32x32xbf16> to vector<1x32x32xbf16>
    tpu.vector_store %arg8[%c0_20, %c0_21, %c0_22], %49 {strides = array<i32>} : memref<1x32x32xbf16, #tpu.memory_space<vmem>>, vector<1x32x32xbf16>,
    return
  }
  func.func @transform_0(%arg0: i32, %arg1: i32) -> (i32, i32, i32) {
    %c0_i32 = arith.constant 0 : i32
    %c0_i32_0 = arith.constant 0 : i32
    return %arg0, %arg1, %c0_i32 : i32, i32, i32
  }
  func.func @transform_1(%arg0: i32, %arg1: i32) -> (i32, i32) {
    %c0_i32 = arith.constant 0 : i32
    %c0_i32_0 = arith.constant 0 : i32
    %c0_i32_1 = arith.constant 0 : i32
    return %c0_i32, %c0_i32_0 : i32, i32
  }
  func.func @transform_2(%arg0: i32, %arg1: i32) -> (i32, i32) {
    %c0_i32 = arith.constant 0 : i32
    %c0_i32_0 = arith.constant 0 : i32
    %c0_i32_1 = arith.constant 0 : i32
    return %c0_i32, %c0_i32_0 : i32, i32
  }
  func.func @transform_3(%arg0: i32, %arg1: i32) -> (i32, i32) {
    %c0_i32 = arith.constant 0 : i32
    %c0_i32_0 = arith.constant 0 : i32
    %c0_i32_1 = arith.constant 0 : i32
    return %c0_i32, %c0_i32_0 : i32, i32
  }
  func.func @transform_4(%arg0: i32, %arg1: i32) -> (i32, i32, i32) {
    %c0_i32 = arith.constant 0 : i32
    %c0_i32_0 = arith.constant 0 : i32
    return %arg0, %arg1, %c0_i32 : i32, i32, i32
  }
  func.func @transform_5(%arg0: i32, %arg1: i32) -> (i32, i32, i32) {
    %c0_i32 = arith.constant 0 : i32
    %c0_i32_0 = arith.constant 0 : i32
    return %arg0, %arg1, %c0_i32 : i32, i32, i32
  }
  func.func @transform_6(%arg0: i32, %arg1: i32) -> (i32, i32, i32) {
    %c0_i32 = arith.constant 0 : i32
    %c0_i32_0 = arith.constant 0 : i32
    return %arg0, %arg1, %c0_i32 : i32, i32, i32
  }
}

</mosaic_0001>

<llo_original>
// kernel: tpu_custom_call.1
$region0: #{tpu_custom_call.1}
  #allocation0 [shape = 'u32[]', space=smem, size = 0x4, offset = 0x4, fixed_abs, tag = 'smem constant byte address 0x4 - core index']
  #allocation1 [shape = 'u32[144,128]{1,0:T(1,128)}', space=vmem, size = 0x12000, scoped, tag = 'internal scratch']
  %s0 = inlined_call_operand.vmem [shape: f32[2,64,32], index: 0, kind: input, shape index: {}]
  %s1 = inlined_call_operand.vmem [shape: f32[1,32], index: 1, kind: input, shape index: {}]
  %s2 = inlined_call_operand.vmem [shape: f32[1,32], index: 2, kind: input, shape index: {}]
  %s3 = inlined_call_operand.vmem [shape: bf16[32,96], index: 3, kind: input, shape index: {}]
  %s4 = inlined_call_operand.vmem [shape: bf16[2,64,32], index: 4, kind: output, shape index: {0}]
  %s5 = inlined_call_operand.vmem [shape: bf16[2,64,32], index: 5, kind: output, shape index: {1}]
  %s6 = inlined_call_operand.vmem [shape: bf16[2,64,32], index: 6, kind: output, shape index: {2}]
  %7 = xla_tuple %s4, %s5, %s6
  %s8 = sld [smem:[#allocation0]]
  $region65: #{tpu_custom_call.1} parent=0
    _
  %s10 = ssub.s32 1, %s8
  %s11 = scalar_select 0, %s10, %s8
  loop: start=0, step=1, limit=6
  $region2: #{tpu_custom_call.1} parent=0 // loop_pre_header
    _
  $region3: #{tpu_custom_call.1} parent=0 // loop_header
    %s13 = sphi 0, %s17
    %p14 = scmp.ge.s32.totalorder %s13, 6
    %s20 = sphi 0, %s32
    %s21 = sphi 0, %s28
    %s22 = sphi 0, %s20
    %s23 = sphi 0, %s21
    %s24 = sphi 0, %s22
    %s25 = sphi 0, %s23
    %s37 = sphi 0, %s39
    %s40 = sphi 0, %s37
    %s41 = sphi 0, %s40
    %s57 = sphi 0, %s41
    %s61 = sphi 0, %s61
    %s63 = sphi 0, %s61
    %s64 = sphi 0, %s63
    %s78 = sphi 0, %s64
    %s82 = sphi 0, %s82
    %s84 = sphi 0, %s82
    %s85 = sphi 0, %s84
    %s99 = sphi 0, %s85
    %s103 = sphi 0, %s103
    %s105 = sphi 0, %s103
    %s106 = sphi 0, %s105
    %s120 = sphi 0, %s106
    %s128 = sphi 0, %s130
    %s131 = sphi 0, %s128
    %s132 = sphi 0, %s131
    %s148 = sphi 0, %s132
    %s156 = sphi 0, %s158
    %s159 = sphi 0, %s156
    %s160 = sphi 0, %s159
    %s176 = sphi 0, %s160
    %s184 = sphi 0, %s186
    %s187 = sphi 0, %s184
    %s188 = sphi 0, %s187
    %s204 = sphi 0, %s188
  $region4: #{tpu_custom_call.1} parent=0 // loop_header_branch
    %16 = sbr.rel (%p14) target = $region8
  $region5: #{tpu_custom_call.1} parent=0 // loop_body
    %s18 = ssub.s32 %s13, 1
    %s19 = ssub.s32 %s13, 2
    %s26 = sadd.s32 1, %s21
    %p27 = scmp.ge.s32.totalorder %s26, 2
    %s28 = scalar_select %p27, 0, %s26
    %s29 = sadd.s32 1, %s20
    %s30 = scalar_select %p27, %s29, %s20
    %p31 = scmp.ge.s32.totalorder %s30, 2
    %s32 = scalar_select %p31, 0, %s30
    %s33 = ssub.s32 %s20, %s32
    %s34 = ssub.s32 %s21, %s28
    %s35 = sor.u32 %s33, %s34
    %p36 = scmp.eq.s32.totalorder %s35, 0
    %s38 = sadd.s32 %s37, 1
    %s39 = scalar_select %p36, %s37, %s38
    %p42 = pneg %p36
    %p43 = scmp.eq.s32.totalorder %s13, 3
    %p44 = por %p42, %p43
    %p45 = scmp.ne.s32.totalorder %s37, %s40
    %p46 = scmp.eq.s32.totalorder %s13, 0
    %p47 = por %p45, %p46
    %p48 = scmp.ne.s32.totalorder %s37, %s40
    %p49 = scmp.eq.s32.totalorder %s18, 3
    %p50 = por %p48, %p49
    %p51 = scmp.ne.s32.totalorder %s40, %s41
    %p52 = scmp.eq.s32.totalorder %s18, 0
    %p53 = por %p51, %p52
    %p54 = scmp.ne.s32.totalorder %s40, %s41
    %p55 = scmp.eq.s32.totalorder %s19, 3
    %p56 = por %p54, %p55
    %p58 = scmp.ne.s32.totalorder %s41, %s57
    %p59 = scmp.eq.s32.totalorder %s19, 0
    %p60 = por %p58, %p59
    %s62 = sadd.s32 %s61, 1
    %p65 = scmp.eq.s32.totalorder %s13, 3
    %p66 = scmp.ne.s32.totalorder %s61, %s63
    %p67 = scmp.eq.s32.totalorder %s13, 0
    %p68 = por %p66, %p67
    %p69 = scmp.ne.s32.totalorder %s61, %s63
    %p70 = scmp.eq.s32.totalorder %s18, 3
    %p71 = por %p69, %p70
    %p72 = scmp.ne.s32.totalorder %s63, %s64
    %p73 = scmp.eq.s32.totalorder %s18, 0
    %p74 = por %p72, %p73
    %p75 = scmp.ne.s32.totalorder %s63, %s64
    %p76 = scmp.eq.s32.totalorder %s19, 3
    %p77 = por %p75, %p76
    %p79 = scmp.ne.s32.totalorder %s64, %s78
    %p80 = scmp.eq.s32.totalorder %s19, 0
    %p81 = por %p79, %p80
    %s83 = sadd.s32 %s82, 1
    %p86 = scmp.eq.s32.totalorder %s13, 3
    %p87 = scmp.ne.s32.totalorder %s82, %s84
    %p88 = scmp.eq.s32.totalorder %s13, 0
    %p89 = por %p87, %p88
    %p90 = scmp.ne.s32.totalorder %s82, %s84
    %p91 = scmp.eq.s32.totalorder %s18, 3
    %p92 = por %p90, %p91
    %p93 = scmp.ne.s32.totalorder %s84, %s85
    %p94 = scmp.eq.s32.totalorder %s18, 0
    %p95 = por %p93, %p94
    %p96 = scmp.ne.s32.totalorder %s84, %s85
    %p97 = scmp.eq.s32.totalorder %s19, 3
    %p98 = por %p96, %p97
    %p100 = scmp.ne.s32.totalorder %s85, %s99
    %p101 = scmp.eq.s32.totalorder %s19, 0
    %p102 = por %p100, %p101
    %s104 = sadd.s32 %s103, 1
    %p107 = scmp.eq.s32.totalorder %s13, 3
    %p108 = scmp.ne.s32.totalorder %s103, %s105
    %p109 = scmp.eq.s32.totalorder %s13, 0
    %p110 = por %p108, %p109
    %p111 = scmp.ne.s32.totalorder %s103, %s105
    %p112 = scmp.eq.s32.totalorder %s18, 3
    %p113 = por %p111, %p112
    %p114 = scmp.ne.s32.totalorder %s105, %s106
    %p115 = scmp.eq.s32.totalorder %s18, 0
    %p116 = por %p114, %p115
    %p117 = scmp.ne.s32.totalorder %s105, %s106
    %p118 = scmp.eq.s32.totalorder %s19, 3
    %p119 = por %p117, %p118
    %p121 = scmp.ne.s32.totalorder %s106, %s120
    %p122 = scmp.eq.s32.totalorder %s19, 0
    %p123 = por %p121, %p122
    %s124 = ssub.s32 %s20, %s32
    %s125 = ssub.s32 %s21, %s28
    %s126 = sor.u32 %s124, %s125
    %p127 = scmp.eq.s32.totalorder %s126, 0
    %s129 = sadd.s32 %s128, 1
    %s130 = scalar_select %p127, %s128, %s129
    %p133 = pneg %p127
    %p134 = scmp.eq.s32.totalorder %s13, 3
    %p135 = por %p133, %p134
    %p136 = scmp.ne.s32.totalorder %s128, %s131
    %p137 = scmp.eq.s32.totalorder %s13, 0
    %p138 = por %p136, %p137
    %p139 = scmp.ne.s32.totalorder %s128, %s131
    %p140 = scmp.eq.s32.totalorder %s18, 3
    %p141 = por %p139, %p140
    %p142 = scmp.ne.s32.totalorder %s131, %s132
    %p143 = scmp.eq.s32.totalorder %s18, 0
    %p144 = por %p142, %p143
    %p145 = scmp.ne.s32.totalorder %s131, %s132
    %p146 = scmp.eq.s32.totalorder %s19, 3
    %p147 = por %p145, %p146
    %p149 = scmp.ne.s32.totalorder %s132, %s148
    %p150 = scmp.eq.s32.totalorder %s19, 0
    %p151 = por %p149, %p150
    %s152 = ssub.s32 %s20, %s32
    %s153 = ssub.s32 %s21, %s28
    %s154 = sor.u32 %s152, %s153
    %p155 = scmp.eq.s32.totalorder %s154, 0
    %s157 = sadd.s32 %s156, 1
    %s158 = scalar_select %p155, %s156, %s157
    %p161 = pneg %p155
    %p162 = scmp.eq.s32.totalorder %s13, 3
    %p163 = por %p161, %p162
    %p164 = scmp.ne.s32.totalorder %s156, %s159
    %p165 = scmp.eq.s32.totalorder %s13, 0
    %p166 = por %p164, %p165
    %p167 = scmp.ne.s32.totalorder %s156, %s159
    %p168 = scmp.eq.s32.totalorder %s18, 3
    %p169 = por %p167, %p168
    %p170 = scmp.ne.s32.totalorder %s159, %s160
    %p171 = scmp.eq.s32.totalorder %s18, 0
    %p172 = por %p170, %p171
    %p173 = scmp.ne.s32.totalorder %s159, %s160
    %p174 = scmp.eq.s32.totalorder %s19, 3
    %p175 = por %p173, %p174
    %p177 = scmp.ne.s32.totalorder %s160, %s176
    %p178 = scmp.eq.s32.totalorder %s19, 0
    %p179 = por %p177, %p178
    %s180 = ssub.s32 %s20, %s32
    %s181 = ssub.s32 %s21, %s28
    %s182 = sor.u32 %s180, %s181
    %p183 = scmp.eq.s32.totalorder %s182, 0
    %s185 = sadd.s32 %s184, 1
    %s186 = scalar_select %p183, %s184, %s185
    %p189 = pneg %p183
    %p190 = scmp.eq.s32.totalorder %s13, 3
    %p191 = por %p189, %p190
    %p192 = scmp.ne.s32.totalorder %s184, %s187
    %p193 = scmp.eq.s32.totalorder %s13, 0
    %p194 = por %p192, %p193
    %p195 = scmp.ne.s32.totalorder %s184, %s187
    %p196 = scmp.eq.s32.totalorder %s18, 3
    %p197 = por %p195, %p196
    %p198 = scmp.ne.s32.totalorder %s187, %s188
    %p199 = scmp.eq.s32.totalorder %s18, 0
    %p200 = por %p198, %p199
    %p201 = scmp.ne.s32.totalorder %s187, %s188
    %p202 = scmp.eq.s32.totalorder %s19, 3
    %p203 = por %p201, %p202
    %p205 = scmp.ne.s32.totalorder %s188, %s204
    %p206 = scmp.eq.s32.totalorder %s19, 0
    %p207 = por %p205, %p206
    %p208 = scmp.le.s32.totalorder 1, %s13
    %p209 = scmp.lt.s32.totalorder %s13, 5
    %p210 = pnand %p208, %p209
    %p211 = pneg %p210
    // Predicated region
    $region9: #{tpu_custom_call.1} parent=5 // pred_check
      _
    $region10: #{tpu_custom_call.1} parent=5 // pred_check_branch
      %213 = sbr.rel (%p210) target = $region12
    $region11: #{tpu_custom_call.1} parent=5 // pred_region
      %s214 = ssub.s32 %s13, 1
      // Predicated region
      $region13: #{tpu_custom_call.1} parent=11 // pred_check
        %p215 = pneg %p74
      $region14: #{tpu_custom_call.1} parent=11 // pred_check_branch
        %217 = sbr.rel (%p215) target = $region16
      $region15: #{tpu_custom_call.1} parent=11 // pred_region
        _
      $region16: #{tpu_custom_call.1} parent=11 // pred_fallthru
        _
      // Predicated region
      $region17: #{tpu_custom_call.1} parent=11 // pred_check
        %p218 = pneg %p95
      $region18: #{tpu_custom_call.1} parent=11 // pred_check_branch
        %220 = sbr.rel (%p218) target = $region20
      $region19: #{tpu_custom_call.1} parent=11 // pred_region
        _
      $region20: #{tpu_custom_call.1} parent=11 // pred_fallthru
        _
      // Predicated region
      $region21: #{tpu_custom_call.1} parent=11 // pred_check
        %p221 = pneg %p116
      $region22: #{tpu_custom_call.1} parent=11 // pred_check_branch
        %223 = sbr.rel (%p221) target = $region24
      $region23: #{tpu_custom_call.1} parent=11 // pred_region
        _
      $region24: #{tpu_custom_call.1} parent=11 // pred_fallthru
        _
    $region12: #{tpu_custom_call.1} parent=5 // pred_fallthru
      _
    %p224 = scmp.lt.s32.totalorder %s13, 4
    // Predicated region
    $region25: #{tpu_custom_call.1} parent=5 // pred_check
      %p225 = pneg %p224
    $region26: #{tpu_custom_call.1} parent=5 // pred_check_branch
      %227 = sbr.rel (%p225) target = $region28
    $region27: #{tpu_custom_call.1} parent=5 // pred_region
      // Predicated region
      $region29: #{tpu_custom_call.1} parent=27 // pred_check
        %p228 = pneg %p47
      $region30: #{tpu_custom_call.1} parent=27 // pred_check_branch
        %230 = sbr.rel (%p228) target = $region32
      $region31: #{tpu_custom_call.1} parent=27 // pred_region
        %s231 = smul.u32 4, %s21
        %p232 = scmp.lt.s32.totalorder %s20, 1
        %s233 = scalar_select %p232, %s20, 1
        %p234 = scmp.lt.s32.totalorder %s231, 7
        %s235 = scalar_select %p234, %s231, 7
        %s236 = smul.addr %s233, 8
        %s237 = sadd.s32 %s235, %s236
        %s238 = smul.addr %s237, 8
        %s239 = scalar_lea.vmem %s0, %s238
        %s240 = smul.u32 4, %s21
      $region32: #{tpu_custom_call.1} parent=27 // pred_fallthru
        _
    $region28: #{tpu_custom_call.1} parent=5 // pred_fallthru
      _
    %p241 = scmp.le.s32.totalorder 1, %s13
    %p242 = scmp.lt.s32.totalorder %s13, 5
    %p243 = pnand %p241, %p242
    %p244 = pneg %p243
    // Predicated region
    $region33: #{tpu_custom_call.1} parent=5 // pred_check
      _
    $region34: #{tpu_custom_call.1} parent=5 // pred_check_branch
      %246 = sbr.rel (%p243) target = $region36
    $region35: #{tpu_custom_call.1} parent=5 // pred_region
      %s247 = ssub.s32 %s13, 1
      %s248 = smul.u32 4, %s23
      %p249 = scmp.lt.s32.totalorder %s22, 1
      %s250 = scalar_select %p249, %s22, 1
      %p251 = scmp.lt.s32.totalorder %s248, 7
      %s252 = scalar_select %p251, %s248, 7
      %s253 = smul.addr %s250, 8
      %s254 = sadd.s32 %s252, %s253
      %s255 = smul.addr %s254, 8
      %s256 = scalar_lea.vmem %s0, %s255
      %p257 = pneg %p53
      %p258 = pneg %p50
      %p259 = pneg %p74
      %p260 = pneg %p71
      %p261 = pneg %p95
      %p262 = pneg %p92
      %p263 = pneg %p116
      %p264 = pneg %p113
      %p265 = pneg %p144
      %p266 = pneg %p141
      %s267 = smul.u32 4, %s23
      %p268 = scmp.lt.s32.totalorder %s22, 1
      %s269 = scalar_select %p268, %s22, 1
      %p270 = scmp.lt.s32.totalorder %s267, 7
      %s271 = scalar_select %p270, %s267, 7
      %s272 = smul.addr %s269, 8
      %s273 = sadd.s32 %s271, %s272
      %s274 = smul.addr %s273, 4
      %s275 = scalar_lea.vmem %s4, %s274
      %p276 = pneg %p172
      %p277 = pneg %p169
      %s278 = smul.u32 4, %s23
      %p279 = scmp.lt.s32.totalorder %s22, 1
      %s280 = scalar_select %p279, %s22, 1
      %p281 = scmp.lt.s32.totalorder %s278, 7
      %s282 = scalar_select %p281, %s278, 7
      %s283 = smul.addr %s280, 8
      %s284 = sadd.s32 %s282, %s283
      %s285 = smul.addr %s284, 4
      %s286 = scalar_lea.vmem %s5, %s285
      %p287 = pneg %p200
      %p288 = pneg %p197
      %s289 = smul.u32 4, %s23
      %p290 = scmp.lt.s32.totalorder %s22, 1
      %s291 = scalar_select %p290, %s22, 1
      %p292 = scmp.lt.s32.totalorder %s289, 7
      %s293 = scalar_select %p292, %s289, 7
      %s294 = smul.addr %s291, 8
      %s295 = sadd.s32 %s293, %s294
      %s296 = smul.addr %s295, 4
      %s297 = scalar_lea.vmem %s6, %s296
      %s298 = smul.u32 4, %s23
      %p299 = scmp.lt.s32.totalorder %s22, 1
      %s300 = scalar_select %p299, %s22, 1
      %p301 = scmp.lt.s32.totalorder %s298, 7
      %s302 = scalar_select %p301, %s298, 7
      %s303 = smul.addr %s300, 8
      %s304 = sadd.s32 %s302, %s303
      %s305 = smul.addr %s304, 8
      %s306 = scalar_lea.vmem %s0, %s305
      %s307 = smul.u32 4, %s23
      %s308 = smul.u32 4, %s23
      %p309 = scmp.lt.s32.totalorder %s22, 1
      %s310 = scalar_select %p309, %s22, 1
      %p311 = scmp.lt.s32.totalorder %s308, 7
      %s312 = scalar_select %p311, %s308, 7
      %s313 = smul.addr %s310, 8
      %s314 = sadd.s32 %s312, %s313
      %s315 = smul.addr %s314, 4
      %s316 = scalar_lea.vmem %s4, %s315
      %s317 = smul.u32 4, %s23
      %s318 = smul.u32 4, %s23
      %p319 = scmp.lt.s32.totalorder %s22, 1
      %s320 = scalar_select %p319, %s22, 1
      %p321 = scmp.lt.s32.totalorder %s318, 7
      %s322 = scalar_select %p321, %s318, 7
      %s323 = smul.addr %s320, 8
      %s324 = sadd.s32 %s322, %s323
      %s325 = smul.addr %s324, 4
      %s326 = scalar_lea.vmem %s5, %s325
      %s327 = smul.u32 4, %s23
      %s328 = smul.u32 4, %s23
      %p329 = scmp.lt.s32.totalorder %s22, 1
      %s330 = scalar_select %p329, %s22, 1
      %p331 = scmp.lt.s32.totalorder %s328, 7
      %s332 = scalar_select %p331, %s328, 7
      %s333 = smul.addr %s330, 8
      %s334 = sadd.s32 %s332, %s333
      %s335 = smul.addr %s334, 4
      %s336 = scalar_lea.vmem %s6, %s335
      %s337 = smul.u32 4, %s23
      %v339 = vld [vmem:[%s306] sm:$0xff]
      %v340 = vld [vmem:[%s306 + $0x8] sm:$0xff]
      %v341 = vld [vmem:[%s306 + $0x10] sm:$0xff]
      %v342 = vld [vmem:[%s306 + $0x18] sm:$0xff]
      %v343 = vld [vmem:[%s1] sm:$0x1]
      %v344 = vld [vmem:[%s2] sm:$0x1]
      %vm345 = vcmask 261120
      %v346 = vsel %vm345, %v339, 0.0
      %347 = vadd.xlane.f32.xlu0 %v346
      %v348 = vpop.xlane.xlu0 %347
      %v349 = vsel %vm345, %v340, 0.0
      %350 = vadd.xlane.f32.xlu0 %v349
      %v351 = vpop.xlane.xlu0 %350
      %v352 = vsel %vm345, %v341, 0.0
      %353 = vadd.xlane.f32.xlu0 %v352
      %v354 = vpop.xlane.xlu0 %353
      %v355 = vsel %vm345, %v342, 0.0
      %356 = vadd.xlane.f32.xlu0 %v355
      %v357 = vpop.xlane.xlu0 %356
      %v358 = vrcp.pop 32.0
      %v359 = vmul.f32 %v348, %v358
      %v360 = vmul.f32 %v351, %v358
      %v361 = vmul.f32 %v354, %v358
      %v362 = vmul.f32 %v357, %v358
      %v363 = vsub.f32 %v339, %v359
      %v364 = vsub.f32 %v340, %v360
      %v365 = vsub.f32 %v341, %v361
      %v366 = vsub.f32 %v342, %v362
      %v367 = vmul.f32 %v363, %v363
      %v368 = vmul.f32 %v364, %v364
      %v369 = vmul.f32 %v365, %v365
      %v370 = vmul.f32 %v366, %v366
      %v371 = vsel %vm345, %v367, 0.0
      %372 = vadd.xlane.f32.xlu0 %v371
      %v373 = vpop.xlane.xlu0 %372
      %v374 = vsel %vm345, %v368, 0.0
      %375 = vadd.xlane.f32.xlu0 %v374
      %v376 = vpop.xlane.xlu0 %375
      %v377 = vsel %vm345, %v369, 0.0
      %378 = vadd.xlane.f32.xlu0 %v377
      %v379 = vpop.xlane.xlu0 %378
      %v380 = vsel %vm345, %v370, 0.0
      %381 = vadd.xlane.f32.xlu0 %v380
      %v382 = vpop.xlane.xlu0 %381
      %v383 = vmul.f32 %v373, %v358
      %v384 = vmul.f32 %v376, %v358
      %v385 = vmul.f32 %v379, %v358
      %v386 = vmul.f32 %v382, %v358
      %v387 = vadd.f32 %v383, 1e-05
      %v388 = vadd.f32 %v384, 1e-05
      %v389 = vadd.f32 %v385, 1e-05
      %v390 = vadd.f32 %v386, 1e-05
      %v391 = vrsqrt.pop %v387
      %v392 = vrsqrt.pop %v388
      %v393 = vrsqrt.pop %v389
      %v394 = vrsqrt.pop %v390
      %v395 = vmul.f32 %v363, %v391
      %v396 = vmul.f32 %v364, %v392
      %v397 = vmul.f32 %v365, %v393
      %v398 = vmul.f32 %v366, %v394
      %v400 = vlaneseq
      %v401 = vshrl.u32 %v400, 7
      %v402 = vsub.s32 0, %v401
      %v403 = vrot.slane %v343, %v402
      %v405 = vmul.f32 %v395, %v403
      %v406 = vmul.f32 %v396, %v403
      %v407 = vmul.f32 %v397, %v403
      %v408 = vmul.f32 %v398, %v403
      %v410 = vlaneseq
      %v411 = vshrl.u32 %v410, 7
      %v412 = vsub.s32 0, %v411
      %v413 = vrot.slane %v344, %v412
      %v415 = vadd.f32 %v405, %v413
      %v416 = vadd.f32 %v406, %v413
      %v417 = vadd.f32 %v407, %v413
      %v418 = vadd.f32 %v408, %v413
      %v419 = vpack.c.bf16 %v416, %v415
      %v420 = vpack.c.bf16 %v418, %v417
      %v421 = vld [vmem:[%s3] sm:$0xf]
      %v422 = vld [vmem:[%s3 + $0x4] sm:$0xf]
      %v423 = vld [vmem:[%s3 + $0x8] sm:$0xf]
      %v424 = vld [vmem:[%s3 + $0xc] sm:$0xf]
      %v429 = vunpack.c.l.b16 %v421
      %v430 = vunpack.c.l.b16 %v422
      %v431 = vunpack.c.l.b16 %v423
      %v432 = vunpack.c.l.b16 %v424
      %v433 = vpack.c.b16 %v430, %v429
      %v434 = vpack.c.b16 %v432, %v431
      %v438 = vsel %vm345, %v419, 0
      %v441 = vsel %vm345, %v420, 0
      %443 = vmatprep.subr.bf16.mxu0 0
      %444 = vmatpush1.bf16.msra.mxu0 0
      %445 = vmatprep.subr.bf16.mxu0 0
      %446 = vmatpush1.bf16.msra.mxu0 0
      %447 = vmatprep.subr.bf16.mxu0 0
      %448 = vmatpush1.bf16.msra.mxu0 0
      %449 = vmatprep.subr.bf16.mxu0 0
      %450 = vmatpush1.bf16.msra.mxu0 0
      %451 = vmatprep.subr.bf16.mxu0 0
      %452 = vmatpush1.bf16.msra.mxu0 0
      %453 = vmatprep.subr.bf16.mxu0 0
      %454 = vmatpush1.bf16.msra.mxu0 0
      %455 = vmatprep.subr.bf16.mxu0 0
      %456 = vmatpush1.bf16.msra.mxu0 %v434
      %457 = vmatprep.subr.bf16.mxu0 0
      %458 = vmatpush1.bf16.msra.mxu0 %v433
      %459 = vmatprep.subr.bf16.mxu0 0
      %460 = vmatpush2.bf16.msra.mxu0 0
      %461 = vmatprep.subr.bf16.mxu0 0
      %462 = vmatpush2.bf16.msra.mxu0 0
      %463 = vmatprep.subr.bf16.mxu0 0
      %464 = vmatpush2.bf16.msra.mxu0 0
      %465 = vmatprep.subr.bf16.mxu0 0
      %466 = vmatpush2.bf16.msra.mxu0 0
      %467 = vmatprep.subr.bf16.mxu0 0
      %468 = vmatpush2.bf16.msra.mxu0 0
      %469 = vmatprep.subr.bf16.mxu0 0
      %470 = vmatpush2.bf16.msra.mxu0 0
      %471 = vmatprep.subr.bf16.mxu0 0
      %472 = vmatpush2.bf16.msra.mxu0 0
      %473 = vmatprep.subr.bf16.mxu0 0
      %474 = vmatpush2.bf16.msra.mxu0 0
      %475 = vmatprep.mubr.bf16.mxu0 0
      %476 = vmatmul.mubr.bf16.gmra.mxu0 %v438
      %v477 = vpop.f32.mrf.mxu0
      %v478 = vadd.f32 0.0, %v477
      %v479 = vpop.f32.mrf.mxu0
      %v480 = vpop.f32.mrf.mxu0
      %v481 = vadd.f32 0.0, %v480
      %v482 = vpop.f32.mrf.mxu0
      %483 = vmatprep.mubr.bf16.mxu0 0
      %484 = vmatmul.mubr.bf16.gmra.mxu0 %v441
      %v485 = vpop.f32.mrf.mxu0
      %v486 = vadd.f32 0.0, %v485
      %v487 = vpop.f32.mrf.mxu0
      %v488 = vpop.f32.mrf.mxu0
      %v489 = vadd.f32 0.0, %v488
      %v490 = vpop.f32.mrf.mxu0
      %491 = vdwg.mxu0
      %v492 = vmul.f32 %v478, 0.35355338
      %v493 = vmul.f32 %v481, 0.35355338
      %v494 = vmul.f32 %v486, 0.35355338
      %v495 = vmul.f32 %v489, 0.35355338
      %v496 = vpack.c.bf16 %v493, %v492
      %v497 = vpack.c.bf16 %v495, %v494
      %v500 = vunpack.c.l.b16 %v496
      %v501 = vunpack.c.h.b16 %v496
      %v502 = vunpack.c.l.b16 %v497
      %v503 = vunpack.c.h.b16 %v497
      %v504 = vpack.c.b16 %v500, %v500
      %v505 = vpack.c.b16 %v501, %v501
      %v506 = vpack.c.b16 %v502, %v502
      %v507 = vpack.c.b16 %v503, %v503
      %vm512 = vcmask 257024
      %513 = vst.msk [vmem:[%s316] sm:$0xf] %vm512, %v504
      %514 = vst.msk [vmem:[%s316 + $0x4] sm:$0xf] %vm512, %v505
      %515 = vst.msk [vmem:[%s316 + $0x8] sm:$0xf] %vm512, %v506
      %516 = vst.msk [vmem:[%s316 + $0xc] sm:$0xf] %vm512, %v507
      %v517 = vpack.c.bf16 %v481, %v478
      %v518 = vpack.c.bf16 %v489, %v486
      %v521 = vunpack.c.l.b16 %v517
      %v522 = vunpack.c.h.b16 %v517
      %v523 = vunpack.c.l.b16 %v518
      %v524 = vunpack.c.h.b16 %v518
      %v525 = vpack.c.b16 %v521, %v521
      %v526 = vpack.c.b16 %v522, %v522
      %v527 = vpack.c.b16 %v523, %v523
      %v528 = vpack.c.b16 %v524, %v524
      %529 = vrot.lane.b32.xlu0 %v525, 96
      %v530 = vpop.permute.xlu0 %529
      %531 = vrot.lane.b32.xlu0 %v526, 96
      %v532 = vpop.permute.xlu0 %531
      %533 = vrot.lane.b32.xlu0 %v527, 96
      %v534 = vpop.permute.xlu0 %533
      %535 = vrot.lane.b32.xlu0 %v528, 96
      %v536 = vpop.permute.xlu0 %535
      %541 = vst.msk [vmem:[%s326] sm:$0xf] %vm512, %v530
      %542 = vst.msk [vmem:[%s326 + $0x4] sm:$0xf] %vm512, %v532
      %543 = vst.msk [vmem:[%s326 + $0x8] sm:$0xf] %vm512, %v534
      %544 = vst.msk [vmem:[%s326 + $0xc] sm:$0xf] %vm512, %v536
      %545 = vrot.lane.b32.xlu0 %v525, 64
      %v546 = vpop.permute.xlu0 %545
      %547 = vrot.lane.b32.xlu0 %v526, 64
      %v548 = vpop.permute.xlu0 %547
      %549 = vrot.lane.b32.xlu0 %v527, 64
      %v550 = vpop.permute.xlu0 %549
      %551 = vrot.lane.b32.xlu0 %v528, 64
      %v552 = vpop.permute.xlu0 %551
      %557 = vst.msk [vmem:[%s336] sm:$0xf] %vm512, %v546
      %558 = vst.msk [vmem:[%s336 + $0x4] sm:$0xf] %vm512, %v548
      %559 = vst.msk [vmem:[%s336 + $0x8] sm:$0xf] %vm512, %v550
      %560 = vst.msk [vmem:[%s336 + $0xc] sm:$0xf] %vm512, %v552
      %s561 = smul.u32 4, %s23
      %p562 = scmp.lt.s32.totalorder %s22, 1
      %s563 = scalar_select %p562, %s22, 1
      %p564 = scmp.lt.s32.totalorder %s561, 7
      %s565 = scalar_select %p564, %s561, 7
      %s566 = smul.addr %s563, 8
      %s567 = sadd.s32 %s565, %s566
      %s568 = smul.addr %s567, 4
      %s569 = scalar_lea.vmem %s4, %s568
      %s570 = smul.u32 4, %s23
      %p571 = scmp.lt.s32.totalorder %s22, 1
      %s572 = scalar_select %p571, %s22, 1
      %p573 = scmp.lt.s32.totalorder %s570, 7
      %s574 = scalar_select %p573, %s570, 7
      %s575 = smul.addr %s572, 8
      %s576 = sadd.s32 %s574, %s575
      %s577 = smul.addr %s576, 4
      %s578 = scalar_lea.vmem %s5, %s577
      %s579 = smul.u32 4, %s23
      %p580 = scmp.lt.s32.totalorder %s22, 1
      %s581 = scalar_select %p580, %s22, 1
      %p582 = scmp.lt.s32.totalorder %s579, 7
      %s583 = scalar_select %p582, %s579, 7
      %s584 = smul.addr %s581, 8
      %s585 = sadd.s32 %s583, %s584
      %s586 = smul.addr %s585, 4
      %s587 = scalar_lea.vmem %s6, %s586
      // Predicated region
      $region37: #{tpu_custom_call.1} parent=35 // pred_check
        %p588 = pneg %p141
      $region38: #{tpu_custom_call.1} parent=35 // pred_check_branch
        %590 = sbr.rel (%p588) target = $region40
      $region39: #{tpu_custom_call.1} parent=35 // pred_region
        %s591 = smul.u32 4, %s23
      $region40: #{tpu_custom_call.1} parent=35 // pred_fallthru
        _
      // Predicated region
      $region41: #{tpu_custom_call.1} parent=35 // pred_check
        %p592 = pneg %p169
      $region42: #{tpu_custom_call.1} parent=35 // pred_check_branch
        %594 = sbr.rel (%p592) target = $region44
      $region43: #{tpu_custom_call.1} parent=35 // pred_region
        %s595 = smul.u32 4, %s23
      $region44: #{tpu_custom_call.1} parent=35 // pred_fallthru
        _
      // Predicated region
      $region45: #{tpu_custom_call.1} parent=35 // pred_check
        %p596 = pneg %p197
      $region46: #{tpu_custom_call.1} parent=35 // pred_check_branch
        %598 = sbr.rel (%p596) target = $region48
      $region47: #{tpu_custom_call.1} parent=35 // pred_region
        %s599 = smul.u32 4, %s23
      $region48: #{tpu_custom_call.1} parent=35 // pred_fallthru
        _
    $region36: #{tpu_custom_call.1} parent=5 // pred_fallthru
      _
    %p600 = scmp.le.s32.totalorder 2, %s13
    // Predicated region
    $region49: #{tpu_custom_call.1} parent=5 // pred_check
      %p601 = pneg %p600
    $region50: #{tpu_custom_call.1} parent=5 // pred_check_branch
      %603 = sbr.rel (%p601) target = $region52
    $region51: #{tpu_custom_call.1} parent=5 // pred_region
      %s604 = ssub.s32 %s13, 2
      // Predicated region
      $region53: #{tpu_custom_call.1} parent=51 // pred_check
        %p605 = pneg %p147
      $region54: #{tpu_custom_call.1} parent=51 // pred_check_branch
        %607 = sbr.rel (%p605) target = $region56
      $region55: #{tpu_custom_call.1} parent=51 // pred_region
        %s608 = smul.u32 4, %s25
        %p609 = scmp.lt.s32.totalorder %s24, 1
        %s610 = scalar_select %p609, %s24, 1
        %p611 = scmp.lt.s32.totalorder %s608, 7
        %s612 = scalar_select %p611, %s608, 7
        %s613 = smul.addr %s610, 8
        %s614 = sadd.s32 %s612, %s613
        %s615 = smul.addr %s614, 4
        %s616 = scalar_lea.vmem %s4, %s615
      $region56: #{tpu_custom_call.1} parent=51 // pred_fallthru
        _
      // Predicated region
      $region57: #{tpu_custom_call.1} parent=51 // pred_check
        %p617 = pneg %p175
      $region58: #{tpu_custom_call.1} parent=51 // pred_check_branch
        %619 = sbr.rel (%p617) target = $region60
      $region59: #{tpu_custom_call.1} parent=51 // pred_region
        %s620 = smul.u32 4, %s25
        %p621 = scmp.lt.s32.totalorder %s24, 1
        %s622 = scalar_select %p621, %s24, 1
        %p623 = scmp.lt.s32.totalorder %s620, 7
        %s624 = scalar_select %p623, %s620, 7
        %s625 = smul.addr %s622, 8
        %s626 = sadd.s32 %s624, %s625
        %s627 = smul.addr %s626, 4
        %s628 = scalar_lea.vmem %s5, %s627
      $region60: #{tpu_custom_call.1} parent=51 // pred_fallthru
        _
      // Predicated region
      $region61: #{tpu_custom_call.1} parent=51 // pred_check
        %p629 = pneg %p203
      $region62: #{tpu_custom_call.1} parent=51 // pred_check_branch
        %631 = sbr.rel (%p629) target = $region64
      $region63: #{tpu_custom_call.1} parent=51 // pred_region
        %s632 = smul.u32 4, %s25
        %p633 = scmp.lt.s32.totalorder %s24, 1
        %s634 = scalar_select %p633, %s24, 1
        %p635 = scmp.lt.s32.totalorder %s632, 7
        %s636 = scalar_select %p635, %s632, 7
        %s637 = smul.addr %s634, 8
        %s638 = sadd.s32 %s636, %s637
        %s639 = smul.addr %s638, 4
        %s640 = scalar_lea.vmem %s6, %s639
      $region64: #{tpu_custom_call.1} parent=51 // pred_fallthru
        _
    $region52: #{tpu_custom_call.1} parent=5 // pred_fallthru
      _
  $region6: #{tpu_custom_call.1} parent=0 // loop_footer
    %s17 = sadd.s32 1, %s13
  $region7: #{tpu_custom_call.1} parent=0 // loop_footer_branch
    %12 = sbr.rel target = $region3
  $region8: #{tpu_custom_call.1} parent=0 // loop_exit
    _

</llo_original>
